<compile_context>
chip_gen: v7x
topology: tpu7x:2x2x1
jax: 0.10.0
libtpu: 0.0.40
codegen_flags: <defaults>
</compile_context>

<pallas_src>
import functools

import jax
import jax.numpy as jnp
from jax.experimental import pallas as pl
from jax.experimental.pallas import tpu as pltpu

INPUT_SIZE = 784
NUM_NEURONS = 10


def custom_layer_kernel(x_ref, w_sum_ref, b_sum_ref, o_ref):
    # x_ref: (TB, D) VMEM, w_sum_ref: (1, D) VMEM, b_sum_ref: (1, 1) SMEM,
    # o_ref: (TB, 1) VMEM.
    # VPU broadcast multiply + XLU lane reduce; bias add fused in-kernel.
    prod = x_ref[...] * w_sum_ref[...]                                  # (TB, D) f32
    o_ref[...] = jnp.sum(prod, axis=-1, keepdims=True) + b_sum_ref[0, 0]


def fold_neurons(w, b):
    """Pre-reduce per-neuron weights/biases once (hoisted out of the per-call path).

    w: (D, N) column-packed per-neuron weights, b: (1, N) per-neuron biases.
    Returns w_sum (1, D) and b_sum (1, 1) in f32.
    """
    w_sum = jnp.sum(w.astype(jnp.float32), axis=1).reshape(1, -1)
    b_sum = jnp.sum(b.astype(jnp.float32)).reshape(1, 1)
    return w_sum, b_sum


@functools.partial(jax.jit, static_argnames=("tb",))
def custom_layer_forward(x, w_sum, b_sum, *, tb=1024):
    x = x.astype(jnp.float32)
    B, D = x.shape
    w_sum = w_sum.reshape(1, D).astype(jnp.float32)
    b_sum = jnp.asarray(b_sum, jnp.float32).reshape(1, 1)
    tb = max(8, (tb + 7) // 8 * 8)  # keep the batch tile sublane-aligned

    if B <= tb:
        # Launch-overhead-bound regime: no grid, whole arrays resident in VMEM,
        # folded bias scalar in SMEM.
        out = pl.pallas_call(
            custom_layer_kernel,
            out_shape=jax.ShapeDtypeStruct((B, 1), jnp.float32),
            in_specs=[
                pl.BlockSpec(memory_space=pltpu.MemorySpace.VMEM),   # x
                pl.BlockSpec(memory_space=pltpu.MemorySpace.VMEM),   # w_sum
                pl.BlockSpec(memory_space=pltpu.MemorySpace.SMEM),   # b_sum
            ],
            out_specs=pl.BlockSpec(memory_space=pltpu.MemorySpace.VMEM),
        )(x, w_sum, b_sum)
        return out[:, 0]

    # Large-batch regime: tile the batch; x is double-buffered by BlockSpec,
    # "parallel" lets v7x's two TensorCores split the tiles.
    nb = pl.cdiv(B, tb)
    b_pad = nb * tb
    if b_pad != B:
        x = jnp.pad(x, ((0, b_pad - B), (0, 0)))
    out = pl.pallas_call(
        custom_layer_kernel,
        out_shape=jax.ShapeDtypeStruct((b_pad, 1), jnp.float32),
        grid_spec=pl.GridSpec(
            grid=(nb,),
            in_specs=[
                pl.BlockSpec((tb, D), lambda i: (i, 0)),             # x tile
                pl.BlockSpec((1, D), lambda i: (0, 0)),              # w_sum (resident)
                pl.BlockSpec(memory_space=pltpu.MemorySpace.SMEM),   # b_sum
            ],
            out_specs=pl.BlockSpec((tb, 1), lambda i: (i, 0)),
        ),
        compiler_params=pltpu.CompilerParams(
            dimension_semantics=("parallel",),
        ),
    )(x, w_sum, b_sum)
    return out[:B, 0]


if __name__ == "__main__":
    key = jax.random.PRNGKey(0)
    kx, kw, kb, kx2 = jax.random.split(key, 4)

    # Small shapes consistent with the module: batch=8, input_size=784, 10 neurons.
    B = 8
    x = jax.random.normal(kx, (B, INPUT_SIZE), dtype=jnp.float32)
    # per-neuron weights (torch.randn(input_size)) packed column-wise into (D, N)
    w = jax.random.normal(kw, (INPUT_SIZE, NUM_NEURONS), dtype=jnp.float32)
    # per-neuron bias (torch.randn(1)) packed into (1, N)
    b = jax.random.normal(kb, (1, NUM_NEURONS), dtype=jnp.float32)

    # Hoisted once; only needs recomputing when neurons are added/pruned.
    w_sum, b_sum = fold_neurons(w, b)

    out = custom_layer_forward(x, w_sum, b_sum)
    out = jax.block_until_ready(out)

    # pure-JAX reference (unfolded form, matches torch.stack(...).sum(-1))
    ref = jnp.sum(x @ w + b, axis=-1)
    assert out.shape == (B,)
    assert jnp.allclose(out, ref, rtol=1e-4, atol=1e-3), (out, ref)

    # Exercise the batch-tiled ("parallel") path at a small size as well.
    B2 = 20
    x2 = jax.random.normal(kx2, (B2, INPUT_SIZE), dtype=jnp.float32)
    out2 = jax.block_until_ready(custom_layer_forward(x2, w_sum, b_sum, tb=8))
    ref2 = jnp.sum(x2 @ w + b, axis=-1)
    assert out2.shape == (B2,)
    assert jnp.allclose(out2, ref2, rtol=1e-4, atol=1e-3), (out2, ref2)

    print("KERNEL_OK")
</pallas_src>

<mosaic_0001>
module attributes {stable_mosaic.version = 11 : i64} {
  func.func @custom_layer_kernel(%arg0: memref<8x784xf32, #tpu.memory_space<vmem>>, %arg1: memref<1x784xf32, #tpu.memory_space<vmem>>, %arg2: memref<1x1xf32, #tpu.memory_space<smem>>, %arg3: memref<8x1xf32, #tpu.memory_space<vmem>>) attributes {dimension_semantics = [], scalar_prefetch = 0 : i64, scratch_operands = 0 : i64, tpu.core_type = #tpu.core_type<tc>} {
    %c0 = arith.constant 0 : index
    %c0_0 = arith.constant 0 : index
    %0 = vector.load %arg0[%c0, %c0_0] : memref<8x784xf32, #tpu.memory_space<vmem>>, vector<8x784xf32>
    %c0_1 = arith.constant 0 : index
    %c0_2 = arith.constant 0 : index
    %1 = vector.load %arg1[%c0_1, %c0_2] : memref<1x784xf32, #tpu.memory_space<vmem>>, vector<1x784xf32>
    %2 = vector.broadcast %1 : vector<1x784xf32> to vector<8x784xf32>
    %3 = arith.mulf %0, %2 : vector<8x784xf32>
    %cst = arith.constant dense<0.000000e+00> : vector<8xf32>
    %4 = vector.multi_reduction <add>, %3, %cst [1] : vector<8x784xf32> to vector<8xf32>
    %5 = vector.shape_cast %4 : vector<8xf32> to vector<8x1xf32>
    %c0_3 = arith.constant 0 : index
    %c0_4 = arith.constant 0 : index
    %6 = memref.load %arg2[%c0_3, %c0_4] : memref<1x1xf32, #tpu.memory_space<smem>>
    %7 = vector.broadcast %6 : f32 to vector<8x1xf32>
    %8 = arith.addf %5, %7 : vector<8x1xf32>
    %c0_5 = arith.constant 0 : index
    %c0_6 = arith.constant 0 : index
    %9 = vector.load %arg3[%c0_5, %c0_6] : memref<8x1xf32, #tpu.memory_space<vmem>>, vector<8x1xf32>
    tpu.vector_store %arg3[%c0_5, %c0_6], %8 {strides = array<i32>} : memref<8x1xf32, #tpu.memory_space<vmem>>, vector<8x1xf32>,
    return
  }
}

</mosaic_0001>

<llo_original>
// kernel: custom_layer_forward.1
$region0: #{custom_layer_forward.1}
  #allocation0 [shape = 'u32[]', space=smem, size = 0x4, offset = 0x4, fixed_abs, tag = 'smem constant byte address 0x4 - core index']
  #allocation1 [shape = 'u32[144,128]{1,0:T(1,128)}', space=vmem, size = 0x12000, scoped, tag = 'internal scratch']
  #allocation2 [shape = 'f32[1,1]{1,0:T(1,128)S(6)}', space=smem, size = 0x200, scoped, tag = 'scoped memory for custom_layer_forward.1']
  %s0 = inlined_call_operand.hbm [shape: f32[8,784], index: 0, kind: input, shape index: {}]
  %s1 = inlined_call_operand.vmem [shape: f32[1,784], index: 1, kind: input, shape index: {}]
  %s2 = inlined_call_operand.<no memory space> [shape: f32[1,1], index: 2, kind: input, shape index: {}]
  %s3 = inlined_call_operand.vmem [shape: f32[8,1], index: 3, kind: output, shape index: {}]
  %s4 = sld [smem:[#allocation0]]
  $region26: #{custom_layer_forward.1} parent=0
    _
  %s6 = ssub.s32 1, %s4
  %s7 = scalar_select 0, %s6, %s4
  %8 = sst [smem:[#allocation2]] %s2
  $region1: #{custom_layer_forward.1} parent=0
    #allocation3 [shape = 'u8[28672]{0}', space=vmem, size = 0x7000, scoped, tag = 'input window, operand 0, single buffered']
    #allocation4 [shape = 's32[1]{0}', space=sflag, size = 0x4, scoped, tag = 'scoped memory for custom_layer_forward.1']
    %9 = vsyncpa [#allocation4], 0
    // Predicated region
    $region2: #{custom_layer_forward.1} parent=1 // pred_check
      _
    $region3: #{custom_layer_forward.1} parent=1 // pred_check_branch
      %11 = sbr.rel (0) target = $region5
    $region4: #{custom_layer_forward.1} parent=1 // pred_region
      %s13 = ssub.s32 896, 896
      %14 = vsyncadd [#allocation4], %s13
      %s16 = sshll.u32 [#allocation3], 4
      %s17 = int_to_ptr.vmem [resolvable:$true] %s16
      %19 = dma.hbm_to_vmem [thread:$0]  %s0, 896, %s17, [#allocation4]
    $region5: #{custom_layer_forward.1} parent=1 // pred_fallthru
      _
    // Predicated region
    $region6: #{custom_layer_forward.1} parent=1 // pred_check
      _
    $region7: #{custom_layer_forward.1} parent=1 // pred_check_branch
      %21 = sbr.rel (0) target = $region9
    $region8: #{custom_layer_forward.1} parent=1 // pred_region
      _
    $region9: #{custom_layer_forward.1} parent=1 // pred_fallthru
      _
    // Predicated region
    $region10: #{custom_layer_forward.1} parent=1 // pred_check
      _
    $region11: #{custom_layer_forward.1} parent=1 // pred_check_branch
      %23 = sbr.rel (0) target = $region13
    $region12: #{custom_layer_forward.1} parent=1 // pred_region
      _
    $region13: #{custom_layer_forward.1} parent=1 // pred_fallthru
      _
    // Predicated region
    $region14: #{custom_layer_forward.1} parent=1 // pred_check
      _
    $region15: #{custom_layer_forward.1} parent=1 // pred_check_branch
      %25 = sbr.rel (0) target = $region17
    $region16: #{custom_layer_forward.1} parent=1 // pred_region
      %26 = dma.done [#allocation4], 896
    $region17: #{custom_layer_forward.1} parent=1 // pred_fallthru
      _
    %v27 = vld [vmem:[#allocation3] sm:$0xff]
    %v28 = vld [vmem:[#allocation3 + $0x8] sm:$0xff]
    %v29 = vld [vmem:[#allocation3 + $0x10] sm:$0xff]
    %v30 = vld [vmem:[#allocation3 + $0x18] sm:$0xff]
    %v31 = vld [vmem:[#allocation3 + $0x20] sm:$0xff]
    %v32 = vld [vmem:[#allocation3 + $0x28] sm:$0xff]
    %v33 = vld [vmem:[#allocation3 + $0x30] sm:$0xff]
    %v34 = vld [vmem:[%s1] sm:$0x7f]
    %v36 = vlaneseq
    %v37 = vshrl.u32 %v36, 7
    %v38 = vsub.s32 0, %v37
    %v39 = vrot.slane %v34, %v38
    %v40 = vlaneseq
    %v41 = vshrl.u32 %v40, 7
    %v42 = vsub.s32 1, %v41
    %v43 = vrot.slane %v34, %v42
    %v44 = vlaneseq
    %v45 = vshrl.u32 %v44, 7
    %v46 = vsub.s32 2, %v45
    %v47 = vrot.slane %v34, %v46
    %v48 = vlaneseq
    %v49 = vshrl.u32 %v48, 7
    %v50 = vsub.s32 3, %v49
    %v51 = vrot.slane %v34, %v50
    %v52 = vlaneseq
    %v53 = vshrl.u32 %v52, 7
    %v54 = vsub.s32 4, %v53
    %v55 = vrot.slane %v34, %v54
    %v56 = vlaneseq
    %v57 = vshrl.u32 %v56, 7
    %v58 = vsub.s32 5, %v57
    %v59 = vrot.slane %v34, %v58
    %v60 = vlaneseq
    %v61 = vshrl.u32 %v60, 7
    %v62 = vsub.s32 6, %v61
    %v63 = vrot.slane %v34, %v62
    %v71 = vmul.f32 %v27, %v39
    %v72 = vmul.f32 %v28, %v43
    %v73 = vmul.f32 %v29, %v47
    %v74 = vmul.f32 %v30, %v51
    %v75 = vmul.f32 %v31, %v55
    %v76 = vmul.f32 %v32, %v59
    %v77 = vmul.f32 %v33, %v63
    %v78 = vadd.f32 %v71, %v72
    %v79 = vadd.f32 %v78, %v73
    %v80 = vadd.f32 %v79, %v74
    %v81 = vadd.f32 %v80, %v75
    %v82 = vadd.f32 %v81, %v76
    %vm83 = vcmask 130048
    %v84 = vsel %vm83, %v77, 0.0
    %v85 = vadd.f32 %v82, %v84
    %86 = vadd.xlane.f32.xlu0 %v85
    %v87 = vpop.xlane.xlu0 %86
    %s88 = sld [smem:[#allocation2]]
    %v89 = vstv %s88
    %v90 = vadd.f32 %v87, %v89
    %vm91 = vcmask 7168
    %92 = vst.msk [vmem:[%s3] sm:$0xff] %vm91, %v90
    // Predicated region
    $region18: #{custom_layer_forward.1} parent=1 // pred_check
      _
    $region19: #{custom_layer_forward.1} parent=1 // pred_check_branch
      %94 = sbr.rel (0) target = $region21
    $region20: #{custom_layer_forward.1} parent=1 // pred_region
      _
    $region21: #{custom_layer_forward.1} parent=1 // pred_fallthru
      _
    // Predicated region
    $region22: #{custom_layer_forward.1} parent=1 // pred_check
      _
    $region23: #{custom_layer_forward.1} parent=1 // pred_check_branch
      %96 = sbr.rel (0) target = $region25
    $region24: #{custom_layer_forward.1} parent=1 // pred_region
      _
    $region25: #{custom_layer_forward.1} parent=1 // pred_fallthru
      _
    %97 = vsyncpa [#allocation4], 1

</llo_original>
